<compile_context>
chip_gen: v5e
topology: v5e:2x2
jax: 0.10.0
libtpu: 0.0.40
codegen_flags: <defaults>
</compile_context>

<pallas_src>
import jax
import jax.numpy as jnp
from jax.experimental import pallas as pl
from jax.experimental.pallas import tpu as pltpu


def _round_up(n, m):
    return ((n + m - 1) // m) * m


def _pad_to(a, shape):
    pads = [(0, s - d) for d, s in zip(a.shape, shape)]
    return jnp.pad(a, pads)


def _make_kernel(n_hidden):
    """Fused MLP: [Linear -> LeakyReLU(0.2) -> Dropout(id)] * n_hidden -> Linear(., 1)."""

    def kernel(*refs):
        x_ref = refs[0]
        o_ref = refs[-1]

        h = x_ref[...]
        idx = 1
        for _ in range(n_hidden):
            w_ref, b_ref = refs[idx], refs[idx + 1]
            idx += 2
            h = jnp.dot(h, w_ref[...], preferred_element_type=jnp.float32) + b_ref[...]
            h = jnp.where(h > 0, h, 0.2 * h)  # LeakyReLU(0.2); Dropout(eval) = identity

        # Final Linear(H, 1): 1-column matmul done as VPU multiply + lane reduce.
        w_ref, b_ref = refs[idx], refs[idx + 1]          # (1, Hp), (1, 1)
        out = jnp.sum(h * w_ref[...], axis=-1, keepdims=True) + b_ref[...]
        o_ref[...] = out.astype(o_ref.dtype)

    return kernel


def _choose_tile_rows(bp, d0p, max_pad_dim, weight_bytes, *, vmem_cap=48 * 1024 * 1024):
    """Pick the largest batch-tile that fits the VMEM budget after weights."""
    # Per batch row: double-buffered x-tile row + ~3 live activation rows + output.
    per_row_bytes = (2 * d0p + 3 * max_pad_dim + 8) * 4
    budget = vmem_cap - 2 * weight_bytes - 2 * 1024 * 1024   # headroom
    tm = budget // per_row_bytes
    tm = max(8, min(1024, (tm // 8) * 8))
    tm = min(tm, _round_up(bp, 8))
    return max(8, tm)


def discriminator_forward(x, params, pack, *, tile_rows=None):
    """x: (B, input_dim) float32. Returns (B // pack, 1) float32."""
    B, input_dim = x.shape
    assert B % pack == 0
    bp = B // pack
    packdim = input_dim * pack
    # Same as torch .view(-1, packdim) on a contiguous tensor.
    xp = x.reshape(bp, packdim)

    n_hidden = len(params) - 1
    # Layer input widths (packdim, then hidden widths), padded to lane multiples of 128.
    layer_dims = [packdim] + [params[i][0].shape[1] for i in range(n_hidden)]
    pad_dims = [_round_up(d, 128) for d in layer_dims]
    d0p = pad_dims[0]
    hlast_p = pad_dims[-1]

    # --- zero-pad parameters to aligned shapes ---
    padded = []
    for i in range(n_hidden):
        w, b = params[i]
        padded.append(_pad_to(w, (pad_dims[i], pad_dims[i + 1])))
        padded.append(_pad_to(b, (1, pad_dims[i + 1])))
    w_last, b_last = params[-1]                                    # (H_last, 1), (1, 1)
    padded.append(_pad_to(w_last.reshape(1, -1), (1, hlast_p)))    # row vector for VPU reduce
    padded.append(b_last)
    weight_bytes = sum(int(a.size) for a in padded) * 4

    # --- tile size over the packed-batch dimension ---
    if tile_rows is None:
        tm = _choose_tile_rows(bp, d0p, max(pad_dims), weight_bytes)
    else:
        tm = max(8, (tile_rows // 8) * 8)
        tm = min(tm, _round_up(bp, 8))
    bp_pad = _round_up(bp, tm)

    # --- zero-pad input batch to a whole number of tiles ---
    xp_p = _pad_to(xp, (bp_pad, d0p))

    # --- BlockSpecs: x streamed per grid step, weights VMEM-resident (constant index_map) ---
    const = lambda i: (0, 0)
    in_specs = [pl.BlockSpec((tm, d0p), lambda i: (i, 0))]
    for i in range(n_hidden):
        in_specs.append(pl.BlockSpec((pad_dims[i], pad_dims[i + 1]), const))
        in_specs.append(pl.BlockSpec((1, pad_dims[i + 1]), const))
    in_specs.append(pl.BlockSpec((1, hlast_p), const))
    in_specs.append(pl.BlockSpec((1, 1), const))
    # One output column per packed row; tiny traffic compared with the x-tile stream,
    # so a lane-dense (1, TM) layout (which would need an XLU transpose) is not worth it.
    out_specs = pl.BlockSpec((tm, 1), lambda i: (i, 0))

    # --- VMEM limit derived from actual footprint (+ headroom), safe for v7x's 64 MiB ---
    act_elems = 3 * tm * max(pad_dims)            # bound on live activation tiles
    vmem_bytes = (2 * tm * d0p + 2 * tm + act_elems) * 4 + 2 * weight_bytes + 2 * 1024 * 1024
    vmem_limit = int(min(max(vmem_bytes, 32 * 1024 * 1024), 60 * 1024 * 1024))

    out = pl.pallas_call(
        _make_kernel(n_hidden),
        out_shape=jax.ShapeDtypeStruct((bp_pad, 1), jnp.float32),
        grid=(bp_pad // tm,),
        in_specs=in_specs,
        out_specs=out_specs,
        compiler_params=pltpu.CompilerParams(
            dimension_semantics=("parallel",),
            vmem_limit_bytes=vmem_limit,
        ),
    )(xp_p, *padded)

    return out[:bp]


def init_params(key, input_dim, dis_dims, pack):
    """Deterministic init mimicking torch.nn.Linear default (uniform +- 1/sqrt(fan_in))."""
    dims = [input_dim * pack] + list(dis_dims) + [1]
    params = []
    for i in range(len(dims) - 1):
        fan_in, fan_out = dims[i], dims[i + 1]
        key, kw, kb = jax.random.split(key, 3)
        bound = 1.0 / (fan_in ** 0.5)
        w = jax.random.uniform(kw, (fan_in, fan_out), jnp.float32, -bound, bound)
        b = jax.random.uniform(kb, (1, fan_out), jnp.float32, -bound, bound)
        params.append((w, b))
    return params


def _reference(x, params, pack):
    """Pure-JAX reference (eval mode)."""
    B, input_dim = x.shape
    h = x.reshape(B // pack, input_dim * pack)
    for w, b in params[:-1]:
        h = h @ w + b
        h = jnp.where(h > 0, h, 0.2 * h)
    w, b = params[-1]
    return h @ w + b


if __name__ == "__main__":
    key = jax.random.PRNGKey(0)

    # --- small case (single grid tile) ---
    input_dim, dis_dims, pack, batch = 16, (32, 32), 2, 8
    k_x, k_p, k2_x, k2_p = jax.random.split(key, 4)
    x = jax.random.normal(k_x, (batch, input_dim), jnp.float32)
    params = init_params(k_p, input_dim, dis_dims, pack)

    out = jax.block_until_ready(discriminator_forward(x, params, pack))
    ref = _reference(x, params, pack)
    assert out.shape == (batch // pack, 1)
    assert jnp.allclose(out, ref, atol=1e-5, rtol=1e-5)

    # --- multi-tile case (exercises grid pipelining + ragged-batch padding) ---
    input_dim2, dis_dims2, pack2, batch2 = 24, (48, 40), 4, 80
    x2 = jax.random.normal(k2_x, (batch2, input_dim2), jnp.float32)
    params2 = init_params(k2_p, input_dim2, dis_dims2, pack2)

    out2 = jax.block_until_ready(
        discriminator_forward(x2, params2, pack2, tile_rows=8)
    )
    ref2 = _reference(x2, params2, pack2)
    assert out2.shape == (batch2 // pack2, 1)
    assert jnp.allclose(out2, ref2, atol=1e-5, rtol=1e-5)

    print("KERNEL_OK")
</pallas_src>

<mosaic_0001>
module attributes {stable_mosaic.version = 11 : i64} {
  func.func @kernel(%arg0: i32, %arg1: memref<8x128xf32, #tpu.memory_space<vmem>>, %arg2: memref<128x128xf32, #tpu.memory_space<vmem>>, %arg3: memref<1x128xf32, #tpu.memory_space<vmem>>, %arg4: memref<128x128xf32, #tpu.memory_space<vmem>>, %arg5: memref<1x128xf32, #tpu.memory_space<vmem>>, %arg6: memref<1x128xf32, #tpu.memory_space<vmem>>, %arg7: memref<1x1xf32, #tpu.memory_space<vmem>>, %arg8: memref<8x1xf32, #tpu.memory_space<vmem>>) attributes {dimension_semantics = [#tpu.dimension_semantics<parallel>], iteration_bounds = array<i64: 1>, scalar_prefetch = 0 : i64, scratch_operands = 0 : i64, tpu.core_type = #tpu.core_type<tc>, window_params = [{transform_indices = @transform_0, window_bounds = array<i64: 8, 128>}, {pipeline_mode = #tpu.pipeline_mode<synchronous>, transform_indices = @transform_1, window_bounds = array<i64: 128, 128>}, {pipeline_mode = #tpu.pipeline_mode<synchronous>, transform_indices = @transform_2, window_bounds = array<i64: 1, 128>}, {pipeline_mode = #tpu.pipeline_mode<synchronous>, transform_indices = @transform_3, window_bounds = array<i64: 128, 128>}, {pipeline_mode = #tpu.pipeline_mode<synchronous>, transform_indices = @transform_4, window_bounds = array<i64: 1, 128>}, {pipeline_mode = #tpu.pipeline_mode<synchronous>, transform_indices = @transform_5, window_bounds = array<i64: 1, 128>}, {pipeline_mode = #tpu.pipeline_mode<synchronous>, transform_indices = @transform_6, window_bounds = array<i64: 1, 1>}, {transform_indices = @transform_7, window_bounds = array<i64: 8, 1>}]} {
    %c0 = arith.constant 0 : index
    %c0_0 = arith.constant 0 : index
    %0 = vector.load %arg1[%c0, %c0_0] : memref<8x128xf32, #tpu.memory_space<vmem>>, vector<8x128xf32>
    %c0_1 = arith.constant 0 : index
    %c0_2 = arith.constant 0 : index
    %1 = vector.load %arg2[%c0_1, %c0_2] : memref<128x128xf32, #tpu.memory_space<vmem>>, vector<128x128xf32>
    %cst = arith.constant dense<0.000000e+00> : vector<8x128xf32>
    %2 = tpu.matmul %0, %1, %cst {dimension_numbers = #tpu.dot_dimension_numbers<[1], [0], [0], [1], [0, 0, 1, 1], [], []>} : vector<8x128xf32>, vector<128x128xf32>, vector<8x128xf32> -> vector<8x128xf32>
    %c0_3 = arith.constant 0 : index
    %c0_4 = arith.constant 0 : index
    %3 = vector.load %arg3[%c0_3, %c0_4] : memref<1x128xf32, #tpu.memory_space<vmem>>, vector<1x128xf32>
    %4 = vector.broadcast %3 : vector<1x128xf32> to vector<8x128xf32>
    %5 = arith.addf %2, %4 : vector<8x128xf32>
    %cst_5 = arith.constant 0.000000e+00 : f32
    %6 = vector.broadcast %cst_5 : f32 to vector<8x128xf32>
    %7 = arith.cmpf ogt, %5, %6 : vector<8x128xf32>
    %cst_6 = arith.constant 2.000000e-01 : f32
    %8 = vector.broadcast %cst_6 : f32 to vector<8x128xf32>
    %9 = arith.mulf %8, %5 : vector<8x128xf32>
    %10 = arith.select %7, %5, %9 : vector<8x128xi1>, vector<8x128xf32>
    %c0_7 = arith.constant 0 : index
    %c0_8 = arith.constant 0 : index
    %11 = vector.load %arg4[%c0_7, %c0_8] : memref<128x128xf32, #tpu.memory_space<vmem>>, vector<128x128xf32>
    %cst_9 = arith.constant dense<0.000000e+00> : vector<8x128xf32>
    %12 = tpu.matmul %10, %11, %cst_9 {dimension_numbers = #tpu.dot_dimension_numbers<[1], [0], [0], [1], [0, 0, 1, 1], [], []>} : vector<8x128xf32>, vector<128x128xf32>, vector<8x128xf32> -> vector<8x128xf32>
    %c0_10 = arith.constant 0 : index
    %c0_11 = arith.constant 0 : index
    %13 = vector.load %arg5[%c0_10, %c0_11] : memref<1x128xf32, #tpu.memory_space<vmem>>, vector<1x128xf32>
    %14 = vector.broadcast %13 : vector<1x128xf32> to vector<8x128xf32>
    %15 = arith.addf %12, %14 : vector<8x128xf32>
    %cst_12 = arith.constant 0.000000e+00 : f32
    %16 = vector.broadcast %cst_12 : f32 to vector<8x128xf32>
    %17 = arith.cmpf ogt, %15, %16 : vector<8x128xf32>
    %cst_13 = arith.constant 2.000000e-01 : f32
    %18 = vector.broadcast %cst_13 : f32 to vector<8x128xf32>
    %19 = arith.mulf %18, %15 : vector<8x128xf32>
    %20 = arith.select %17, %15, %19 : vector<8x128xi1>, vector<8x128xf32>
    %c0_14 = arith.constant 0 : index
    %c0_15 = arith.constant 0 : index
    %21 = vector.load %arg6[%c0_14, %c0_15] : memref<1x128xf32, #tpu.memory_space<vmem>>, vector<1x128xf32>
    %22 = vector.broadcast %21 : vector<1x128xf32> to vector<8x128xf32>
    %23 = arith.mulf %20, %22 : vector<8x128xf32>
    %cst_16 = arith.constant dense<0.000000e+00> : vector<8xf32>
    %24 = vector.multi_reduction <add>, %23, %cst_16 [1] : vector<8x128xf32> to vector<8xf32>
    %25 = vector.shape_cast %24 : vector<8xf32> to vector<8x1xf32>
    %c0_17 = arith.constant 0 : index
    %c0_18 = arith.constant 0 : index
    %26 = vector.load %arg7[%c0_17, %c0_18] : memref<1x1xf32, #tpu.memory_space<vmem>>, vector<1x1xf32>
    %27 = vector.broadcast %26 : vector<1x1xf32> to vector<8x1xf32>
    %28 = arith.addf %25, %27 : vector<8x1xf32>
    %c0_19 = arith.constant 0 : index
    %c0_20 = arith.constant 0 : index
    %29 = vector.load %arg8[%c0_19, %c0_20] : memref<8x1xf32, #tpu.memory_space<vmem>>, vector<8x1xf32>
    tpu.vector_store %arg8[%c0_19, %c0_20], %28 {strides = array<i32>} : memref<8x1xf32, #tpu.memory_space<vmem>>, vector<8x1xf32>,
    return
  }
  func.func @transform_0(%arg0: i32) -> (i32, i32) {
    %c0_i32 = arith.constant 0 : i32
    %c0_i32_0 = arith.constant 0 : i32
    return %arg0, %c0_i32 : i32, i32
  }
  func.func @transform_1(%arg0: i32) -> (i32, i32) {
    %c0_i32 = arith.constant 0 : i32
    %c0_i32_0 = arith.constant 0 : i32
    %c0_i32_1 = arith.constant 0 : i32
    return %c0_i32, %c0_i32_0 : i32, i32
  }
  func.func @transform_2(%arg0: i32) -> (i32, i32) {
    %c0_i32 = arith.constant 0 : i32
    %c0_i32_0 = arith.constant 0 : i32
    %c0_i32_1 = arith.constant 0 : i32
    return %c0_i32, %c0_i32_0 : i32, i32
  }
  func.func @transform_3(%arg0: i32) -> (i32, i32) {
    %c0_i32 = arith.constant 0 : i32
    %c0_i32_0 = arith.constant 0 : i32
    %c0_i32_1 = arith.constant 0 : i32
    return %c0_i32, %c0_i32_0 : i32, i32
  }
  func.func @transform_4(%arg0: i32) -> (i32, i32) {
    %c0_i32 = arith.constant 0 : i32
    %c0_i32_0 = arith.constant 0 : i32
    %c0_i32_1 = arith.constant 0 : i32
    return %c0_i32, %c0_i32_0 : i32, i32
  }
  func.func @transform_5(%arg0: i32) -> (i32, i32) {
    %c0_i32 = arith.constant 0 : i32
    %c0_i32_0 = arith.constant 0 : i32
    %c0_i32_1 = arith.constant 0 : i32
    return %c0_i32, %c0_i32_0 : i32, i32
  }
  func.func @transform_6(%arg0: i32) -> (i32, i32) {
    %c0_i32 = arith.constant 0 : i32
    %c0_i32_0 = arith.constant 0 : i32
    %c0_i32_1 = arith.constant 0 : i32
    return %c0_i32, %c0_i32_0 : i32, i32
  }
  func.func @transform_7(%arg0: i32) -> (i32, i32) {
    %c0_i32 = arith.constant 0 : i32
    %c0_i32_0 = arith.constant 0 : i32
    return %arg0, %c0_i32 : i32, i32
  }
}

</mosaic_0001>

<llo_original>
// kernel: tpu_custom_call.1
$region0: #{tpu_custom_call.1}
  #allocation0 [shape = 'u32[]', space=smem, size = 0x4, offset = 0x4, fixed_abs, tag = 'smem constant byte address 0x4 - core index']
  #allocation1 [shape = 'u32[72,128]{1,0:T(1,128)}', space=vmem, size = 0x9000, scoped, tag = 'internal scratch']
  #allocation2 [shape = 'f32[1,1]{1,0:T(1,128)S(1)}', space=vmem, size = 0x200, scoped, tag = 'scoped memory for tpu_custom_call.1']
  %s0 = inlined_call_operand.hbm [shape: f32[8,128], index: 0, kind: input, shape index: {}]
  %s1 = inlined_call_operand.hbm [shape: f32[128,128], index: 1, kind: input, shape index: {}]
  %s2 = inlined_call_operand.vmem [shape: f32[1,128], index: 2, kind: input, shape index: {}]
  %s3 = inlined_call_operand.hbm [shape: f32[128,128], index: 3, kind: input, shape index: {}]
  %s4 = inlined_call_operand.vmem [shape: f32[1,128], index: 4, kind: input, shape index: {}]
  %s5 = inlined_call_operand.vmem [shape: f32[1,128], index: 5, kind: input, shape index: {}]
  %s6 = inlined_call_operand.<no memory space> [shape: f32[1,1], index: 6, kind: input, shape index: {}]
  %s7 = inlined_call_operand.vmem [shape: f32[8,1], index: 7, kind: output, shape index: {}]
  %s8 = sld [smem:[#allocation0]]
  $region50: #{tpu_custom_call.1} parent=0
    _
  %s10 = ssub.s32 1, %s8
  %s11 = scalar_select 0, %s10, %s8
  %v12 = vstv %s6
  %13 = vst [vmem:[#allocation2] sm:$0x1] %v12
  $region1: #{tpu_custom_call.1} parent=0
    #allocation3 [shape = 'u8[4096]{0}', space=vmem, size = 0x1000, scoped, tag = 'input window, operand 0, single buffered']
    #allocation4 [shape = 's32[1]{0}', space=sflag, size = 0x4, scoped, tag = 'scoped memory for tpu_custom_call.1']
    #allocation5 [shape = 'u8[65536]{0}', space=vmem, size = 0x10000, scoped, tag = 'input window, operand 1, single buffered']
    #allocation6 [shape = 's32[1]{0}', space=sflag, size = 0x4, scoped, tag = 'scoped memory for tpu_custom_call.1']
    #allocation7 [shape = 'u8[65536]{0}', space=vmem, size = 0x10000, scoped, tag = 'input window, operand 3, single buffered']
    %14 = vsyncpa [#allocation4], 0
    %15 = vsyncpa [#allocation6], 0
    // Predicated region
    $region2: #{tpu_custom_call.1} parent=1 // pred_check
      _
    $region3: #{tpu_custom_call.1} parent=1 // pred_check_branch
      %17 = sbr.rel (0) target = $region5
    $region4: #{tpu_custom_call.1} parent=1 // pred_region
      %19 = vsyncadd [#allocation4], 0
      %s21 = sshll.u32 %s0, 4
      %s22 = int_to_ptr.hbm [resolvable:$true] %s21
      %s23 = sshll.u32 [#allocation3], 4
      %s24 = int_to_ptr.vmem [resolvable:$true] %s23
      %26 = dma.hbm_to_vmem [thread:$0]  %s22, 128, %s24, [#allocation4]
    $region5: #{tpu_custom_call.1} parent=1 // pred_fallthru
      _
    // Predicated region
    $region6: #{tpu_custom_call.1} parent=1 // pred_check
      _
    $region7: #{tpu_custom_call.1} parent=1 // pred_check_branch
      %28 = sbr.rel (0) target = $region9
    $region8: #{tpu_custom_call.1} parent=1 // pred_region
      %30 = vsyncadd [#allocation6], 0
      %s31 = sshll.u32 %s1, 4
      %s32 = int_to_ptr.hbm [resolvable:$true] %s31
      %s33 = sshll.u32 [#allocation5], 4
      %s34 = int_to_ptr.vmem [resolvable:$true] %s33
      %39 = dma.hbm_to_vmem [thread:$0]  %s32, 2048, %s34, [#allocation6], 128, 128, 8
    $region9: #{tpu_custom_call.1} parent=1 // pred_fallthru
      _
    // Predicated region
    $region10: #{tpu_custom_call.1} parent=1 // pred_check
      _
    $region11: #{tpu_custom_call.1} parent=1 // pred_check_branch
      %41 = sbr.rel (0) target = $region13
    $region12: #{tpu_custom_call.1} parent=1 // pred_region
      _
    $region13: #{tpu_custom_call.1} parent=1 // pred_fallthru
      _
    // Predicated region
    $region14: #{tpu_custom_call.1} parent=1 // pred_check
      _
    $region15: #{tpu_custom_call.1} parent=1 // pred_check_branch
      %43 = sbr.rel (0) target = $region17
    $region16: #{tpu_custom_call.1} parent=1 // pred_region
      %45 = vsyncadd [#allocation6], 0
      %s46 = sshll.u32 %s3, 4
      %s47 = int_to_ptr.hbm [resolvable:$true] %s46
      %s48 = sshll.u32 [#allocation7], 4
      %s49 = int_to_ptr.vmem [resolvable:$true] %s48
      %54 = dma.hbm_to_vmem [thread:$0]  %s47, 2048, %s49, [#allocation6], 128, 128, 8
    $region17: #{tpu_custom_call.1} parent=1 // pred_fallthru
      _
    // Predicated region
    $region18: #{tpu_custom_call.1} parent=1 // pred_check
      _
    $region19: #{tpu_custom_call.1} parent=1 // pred_check_branch
      %56 = sbr.rel (0) target = $region21
    $region20: #{tpu_custom_call.1} parent=1 // pred_region
      _
    $region21: #{tpu_custom_call.1} parent=1 // pred_fallthru
      _
    // Predicated region
    $region22: #{tpu_custom_call.1} parent=1 // pred_check
      _
    $region23: #{tpu_custom_call.1} parent=1 // pred_check_branch
      %58 = sbr.rel (0) target = $region25
    $region24: #{tpu_custom_call.1} parent=1 // pred_region
      _
    $region25: #{tpu_custom_call.1} parent=1 // pred_fallthru
      _
    // Predicated region
    $region26: #{tpu_custom_call.1} parent=1 // pred_check
      _
    $region27: #{tpu_custom_call.1} parent=1 // pred_check_branch
      %60 = sbr.rel (0) target = $region29
    $region28: #{tpu_custom_call.1} parent=1 // pred_region
      _
    $region29: #{tpu_custom_call.1} parent=1 // pred_fallthru
      _
    // Predicated region
    $region30: #{tpu_custom_call.1} parent=1 // pred_check
      _
    $region31: #{tpu_custom_call.1} parent=1 // pred_check_branch
      %62 = sbr.rel (0) target = $region33
    $region32: #{tpu_custom_call.1} parent=1 // pred_region
      %64 = dma.done [#allocation4], 128
    $region33: #{tpu_custom_call.1} parent=1 // pred_fallthru
      _
    // Predicated region
    $region34: #{tpu_custom_call.1} parent=1 // pred_check
      _
    $region35: #{tpu_custom_call.1} parent=1 // pred_check_branch
      %66 = sbr.rel (0) target = $region37
    $region36: #{tpu_custom_call.1} parent=1 // pred_region
      %68 = dma.done [#allocation6], 2048
    $region37: #{tpu_custom_call.1} parent=1 // pred_fallthru
      _
    // Predicated region
    $region38: #{tpu_custom_call.1} parent=1 // pred_check
      _
    $region39: #{tpu_custom_call.1} parent=1 // pred_check_branch
      %70 = sbr.rel (0) target = $region41
    $region40: #{tpu_custom_call.1} parent=1 // pred_region
      %72 = dma.done [#allocation6], 2048
    $region41: #{tpu_custom_call.1} parent=1 // pred_fallthru
      _
    %v73 = vld [vmem:[#allocation3] sm:$0xff]
    %v74 = vld [vmem:[#allocation5] sm:$0xff]
    %v75 = vld [vmem:[#allocation5 + $0x8] sm:$0xff]
    %v76 = vld [vmem:[#allocation5 + $0x10] sm:$0xff]
    %v77 = vld [vmem:[#allocation5 + $0x18] sm:$0xff]
    %v78 = vld [vmem:[#allocation5 + $0x20] sm:$0xff]
    %v79 = vld [vmem:[#allocation5 + $0x28] sm:$0xff]
    %v80 = vld [vmem:[#allocation5 + $0x30] sm:$0xff]
    %v81 = vld [vmem:[#allocation5 + $0x38] sm:$0xff]
    %v82 = vld [vmem:[#allocation5 + $0x40] sm:$0xff]
    %v83 = vld [vmem:[#allocation5 + $0x48] sm:$0xff]
    %v84 = vld [vmem:[#allocation5 + $0x50] sm:$0xff]
    %v85 = vld [vmem:[#allocation5 + $0x58] sm:$0xff]
    %v86 = vld [vmem:[#allocation5 + $0x60] sm:$0xff]
    %v87 = vld [vmem:[#allocation5 + $0x68] sm:$0xff]
    %v88 = vld [vmem:[#allocation5 + $0x70] sm:$0xff]
    %v89 = vld [vmem:[#allocation5 + $0x78] sm:$0xff]
    %v90 = vld [vmem:[%s2] sm:$0x1]
    %v92 = vperm.slane %v90, 0
    %94 = vmatpush.msra.mxu0 %v89
    %95 = vmatpush.msra.mxu0 %v88
    %96 = vmatpush.msra.mxu0 %v87
    %97 = vmatpush.msra.mxu0 %v86
    %98 = vmatpush.msra.mxu0 %v85
    %99 = vmatpush.msra.mxu0 %v84
    %100 = vmatpush.msra.mxu0 %v83
    %101 = vmatpush.msra.mxu0 %v82
    %102 = vmatpush.msra.mxu0 %v81
    %103 = vmatpush.msra.mxu0 %v80
    %104 = vmatpush.msra.mxu0 %v79
    %105 = vmatpush.msra.mxu0 %v78
    %106 = vmatpush.msra.mxu0 %v77
    %107 = vmatpush.msra.mxu0 %v76
    %108 = vmatpush.msra.mxu0 %v75
    %109 = vmatpush.msra.mxu0 %v74
    %110 = vmatmul.f32.gmra.mxu0 %v73
    %v111 = vpop.f32.mrf.mxu0
    %v112 = vadd.f32 %v92, %v111
    %113 = vdwg.mxu0
    %vm114 = vcmp.gt.f32.partialorder %v112, 0.0
    %v115 = vmul.f32 %v112, 0.2
    %v116 = vsel %vm114, %v112, %v115
    %v117 = vld [vmem:[#allocation7] sm:$0xff]
    %v118 = vld [vmem:[#allocation7 + $0x8] sm:$0xff]
    %v119 = vld [vmem:[#allocation7 + $0x10] sm:$0xff]
    %v120 = vld [vmem:[#allocation7 + $0x18] sm:$0xff]
    %v121 = vld [vmem:[#allocation7 + $0x20] sm:$0xff]
    %v122 = vld [vmem:[#allocation7 + $0x28] sm:$0xff]
    %v123 = vld [vmem:[#allocation7 + $0x30] sm:$0xff]
    %v124 = vld [vmem:[#allocation7 + $0x38] sm:$0xff]
    %v125 = vld [vmem:[#allocation7 + $0x40] sm:$0xff]
    %v126 = vld [vmem:[#allocation7 + $0x48] sm:$0xff]
    %v127 = vld [vmem:[#allocation7 + $0x50] sm:$0xff]
    %v128 = vld [vmem:[#allocation7 + $0x58] sm:$0xff]
    %v129 = vld [vmem:[#allocation7 + $0x60] sm:$0xff]
    %v130 = vld [vmem:[#allocation7 + $0x68] sm:$0xff]
    %v131 = vld [vmem:[#allocation7 + $0x70] sm:$0xff]
    %v132 = vld [vmem:[#allocation7 + $0x78] sm:$0xff]
    %v133 = vld [vmem:[%s4] sm:$0x1]
    %v135 = vperm.slane %v133, 0
    %137 = vmatpush.msra.mxu0 %v132
    %138 = vmatpush.msra.mxu0 %v131
    %139 = vmatpush.msra.mxu0 %v130
    %140 = vmatpush.msra.mxu0 %v129
    %141 = vmatpush.msra.mxu0 %v128
    %142 = vmatpush.msra.mxu0 %v127
    %143 = vmatpush.msra.mxu0 %v126
    %144 = vmatpush.msra.mxu0 %v125
    %145 = vmatpush.msra.mxu0 %v124
    %146 = vmatpush.msra.mxu0 %v123
    %147 = vmatpush.msra.mxu0 %v122
    %148 = vmatpush.msra.mxu0 %v121
    %149 = vmatpush.msra.mxu0 %v120
    %150 = vmatpush.msra.mxu0 %v119
    %151 = vmatpush.msra.mxu0 %v118
    %152 = vmatpush.msra.mxu0 %v117
    %153 = vmatmul.f32.gmra.mxu0 %v116
    %v154 = vpop.f32.mrf.mxu0
    %v155 = vadd.f32 %v135, %v154
    %156 = vdwg.mxu0
    %vm157 = vcmp.gt.f32.partialorder %v155, 0.0
    %v158 = vmul.f32 %v155, 0.2
    %v159 = vsel %vm157, %v155, %v158
    %v160 = vld [vmem:[%s5] sm:$0x1]
    %v162 = vperm.slane %v160, 0
    %v164 = vmul.f32 %v159, %v162
    %165 = vadd.xlane.f32.xlu0 %v164
    %v166 = vpop.xlane.xlu0 %165
    %v167 = vld [vmem:[#allocation2] sm:$0x1]
    %v169 = vperm.slane %v167, 0
    %v171 = vadd.f32 %v166, %v169
    %vm172 = vcmask 7168
    %173 = vst.msk [vmem:[%s7] sm:$0xff] %vm172, %v171
    // Predicated region
    $region42: #{tpu_custom_call.1} parent=1 // pred_check
      _
    $region43: #{tpu_custom_call.1} parent=1 // pred_check_branch
      %175 = sbr.rel (0) target = $region45
    $region44: #{tpu_custom_call.1} parent=1 // pred_region
      _
    $region45: #{tpu_custom_call.1} parent=1 // pred_fallthru
      _
    // Predicated region
    $region46: #{tpu_custom_call.1} parent=1 // pred_check
      _
    $region47: #{tpu_custom_call.1} parent=1 // pred_check_branch
      %177 = sbr.rel (0) target = $region49
    $region48: #{tpu_custom_call.1} parent=1 // pred_region
      _
    $region49: #{tpu_custom_call.1} parent=1 // pred_fallthru
      _
    %178 = vsyncpa [#allocation4], 1
    %179 = vsyncpa [#allocation6], 1

</llo_original>
